<compile_context>
chip_gen: v7x
topology: tpu7x:2x2x1
jax: 0.10.0
libtpu: 0.0.40
codegen_flags: <defaults>
</compile_context>

<pallas_src>
import math
import jax
import jax.numpy as jnp
from jax import lax
from jax.experimental import pallas as pl
from jax.experimental.pallas import tpu as pltpu


def _round_up(a, b):
    return ((a + b - 1) // b) * b


def _pad_to(a, axis, target):
    pad = target - a.shape[axis]
    if pad <= 0:
        return a
    widths = [(0, 0)] * a.ndim
    widths[axis] = (0, pad)
    return jnp.pad(a, widths)


def _margin_epilogue(raw, sw, lbl, s, m1, m2, bn, j_block):
    """raw: (bm,bn) f32 = x_norm @ W_raw.T tile; sw: (1,bn) = s/||w_j||;
    lbl: (bm,1) int32 global labels; j_block: class-tile index.
    Returns s*(one_hot*phi + (1-one_hot)*phj) for this tile (all constants
    folded at trace time)."""
    g = raw * sw                                     # g = s * cosine
    lbl_local = lbl - j_block * bn                   # (bm, 1) cheap vector op
    col = lax.broadcasted_iota(jnp.int32, raw.shape, 1)
    is_target = col == lbl_local
    if m1 == m2:
        base = g + (m1 / s) * (g * g)                # = s*phj ; s*phi = base - s*m1
        return jnp.where(is_target, base - s * m1, base)
    g2 = g * g
    a = (m1 / s) * g2 - s * m1                       # s*phi - g
    b = (m2 / s) * g2                                # s*phj - g
    return g + jnp.where(is_target, a, b)


def make_miniloss_kernel(s, m1, m2, bn):
    def kernel(x_ref, lbl_ref, w_ref, sw_ref, o_ref):
        raw = lax.dot_general(
            x_ref[...], w_ref[...],
            dimension_numbers=(((1,), (1,)), ((), ())),
            preferred_element_type=jnp.float32)      # MXU, f32 accumulation
        o_ref[...] = _margin_epilogue(
            raw, sw_ref[...], lbl_ref[...], s, m1, m2, bn,
            pl.program_id(1)).astype(o_ref.dtype)
    return kernel


def make_miniloss_ksplit_kernel(s, m1, m2, bn):
    def kernel(x_ref, lbl_ref, w_ref, sw_ref, o_ref, acc_ref):
        k = pl.program_id(2)

        @pl.when(k == 0)
        def _():
            acc_ref[...] = jnp.zeros_like(acc_ref)

        acc_ref[...] += lax.dot_general(
            x_ref[...], w_ref[...],
            dimension_numbers=(((1,), (1,)), ((), ())),
            preferred_element_type=jnp.float32)

        @pl.when(k == pl.num_programs(2) - 1)
        def _():
            o_ref[...] = _margin_epilogue(
                acc_ref[...], sw_ref[...], lbl_ref[...], s, m1, m2, bn,
                pl.program_id(1)).astype(o_ref.dtype)
    return kernel


def _pick_bn(N):
    """Lane-dense class tile (multiple of 128); prefer larger tiles only when
    padding waste stays small and there are >=2 tiles (megacore)."""
    for cand in (512, 256):
        if N >= 2 * cand and (_round_up(N, cand) - N) * 8 <= N:
            return cand
    return 128


def _pick_bm(B, tk, bn, x_item, out_item, with_acc, budget=40 << 20):
    """Largest batch tile whose double-buffered working set fits the budget,
    then rebalanced so B-padding waste stays small."""
    b_full = _round_up(max(B, 1), 8)

    def working_set(bm):
        return (2 * bm * tk * x_item        # x tile (double-buffered)
                + 2 * bn * tk * x_item      # weight tile (same matmul dtype)
                + 2 * bm * bn * out_item    # output tile
                + 2 * bm * 4 + 2 * bn * 4   # labels + s/||w||
                + (bm * bn * 4 if with_acc else 0))

    bm0 = 8
    for cand in (4096, 2048, 1024, 512, 256, 128, 64, 32, 16, 8):
        bm = min(cand, b_full)
        if working_set(bm) <= budget:
            bm0 = bm
            break
    nb = -(-B // bm0)
    mult = 256 if bm0 >= 256 else 8         # MXU-friendly when large
    bm = min(_round_up(-(-B // nb), mult), bm0)
    return max(bm, 8)


def miniloss_forward(x, label, weight, *, s=64.0, m1=0.5, m2=0.5,
                     matmul_dtype=jnp.bfloat16, out_dtype=jnp.float32,
                     bm=None, bn=None):
    """x: (B, K), label: (B,) int, weight: (N, K) -> (B, N) out_dtype."""
    B, K = x.shape
    N, K2 = weight.shape
    assert K == K2, "in_features mismatch"
    s, m1, m2 = float(s), float(m1), float(m2)

    x = x.astype(jnp.float32)
    weight = weight.astype(jnp.float32)

    # ---- one-time (per call) XLA-side preprocessing ----
    # Pre-normalize x rows in f32 (matches F.normalize eps=1e-12), then cast so
    # the HBM stream itself is narrow; fold s into the per-class inverse norm.
    inv_xn = lax.rsqrt(jnp.maximum(jnp.sum(x * x, axis=1, keepdims=True), 1e-24))
    x_n = (x * inv_xn).astype(matmul_dtype)
    w_c = weight.astype(matmul_dtype)
    s_inv_wn = (s * lax.rsqrt(jnp.maximum(jnp.sum(weight * weight, axis=1), 1e-24))
                ).reshape(1, N).astype(jnp.float32)
    label2d = label.reshape(B, 1).astype(jnp.int32)

    x_item = jnp.dtype(matmul_dtype).itemsize
    out_item = jnp.dtype(out_dtype).itemsize

    # K-split only for very large reduction dims (caps per-step VMEM on v7x's
    # 64 MiB/TC); the module's default K=512 takes the 2-D fast path.
    use_ksplit = K > 2048
    tk = 1024 if use_ksplit else K
    Kp = _round_up(K, tk)

    if bn is None:
        bn = _pick_bn(N)
    if bm is None:
        bm = _pick_bm(B, tk, bn, x_item, out_item, use_ksplit)

    Bp, Np = _round_up(B, bm), _round_up(N, bn)
    if Bp != B:
        x_n = _pad_to(x_n, 0, Bp)
        label2d = _pad_to(label2d, 0, Bp)
    if Np != N:
        w_c = _pad_to(w_c, 0, Np)
        s_inv_wn = _pad_to(s_inv_wn, 1, Np)
    if Kp != K:
        x_n = _pad_to(x_n, 1, Kp)
        w_c = _pad_to(w_c, 1, Kp)

    nb, nn, nk = Bp // bm, Np // bn, Kp // tk

    ws_bytes = (2 * bm * tk * x_item + 2 * bn * tk * x_item
                + 2 * bm * bn * out_item + 2 * bm * 4 + 2 * bn * 4
                + (bm * bn * 4 if use_ksplit else 0))
    # Raise the scoped VMEM limit explicitly (v5e default 16 MiB); keep it
    # under v7x's 64 MiB physical VMEM per TensorCore.
    vmem_limit = int(min(56 << 20, max(32 << 20, ws_bytes + (8 << 20))))

    cost = pl.CostEstimate(
        flops=2 * B * N * K,
        transcendentals=0,
        bytes_accessed=int(Bp * Kp * x_item            # x fetched once
                           + nb * Np * Kp * x_item     # W re-streamed per batch tile
                           + Bp * Np * out_item + Bp * 4 + Np * 4),
    )

    if not use_ksplit:
        # Batch axis OUTER, class axis inner: x/labels DMA'd once; the smaller
        # weight tile is the re-streamed operand.
        grid = (nb, nn)
        x_spec = pl.BlockSpec((bm, Kp), lambda i, j: (i, 0))
        lbl_spec = pl.BlockSpec((bm, 1), lambda i, j: (i, 0))
        w_map = lambda i, j: (j, 0)
        sw_map = lambda i, j: (0, j)
        if bm <= 256 and nn >= 4:
            # Small-bm regime: deepen weight buffering to hide exposed DMA.
            w_spec = pl.BlockSpec((bn, Kp), w_map, pipeline_mode=pl.Buffered(3))
            sw_spec = pl.BlockSpec((1, bn), sw_map, pipeline_mode=pl.Buffered(3))
        else:
            w_spec = pl.BlockSpec((bn, Kp), w_map)
            sw_spec = pl.BlockSpec((1, bn), sw_map)
        out_spec = pl.BlockSpec((bm, bn), lambda i, j: (i, j))
        scratch = []
        dims = ("parallel", "parallel")
        kernel = make_miniloss_kernel(s, m1, m2, bn)
    else:
        grid = (nb, nn, nk)        # K innermost, accumulated in a VMEM scratch
        x_spec = pl.BlockSpec((bm, tk), lambda i, j, k: (i, k))
        lbl_spec = pl.BlockSpec((bm, 1), lambda i, j, k: (i, 0))
        w_spec = pl.BlockSpec((bn, tk), lambda i, j, k: (j, k))
        sw_spec = pl.BlockSpec((1, bn), lambda i, j, k: (0, j))
        out_spec = pl.BlockSpec((bm, bn), lambda i, j, k: (i, j))
        scratch = [pltpu.VMEM((bm, bn), jnp.float32)]
        dims = ("parallel", "parallel", "arbitrary")
        kernel = make_miniloss_ksplit_kernel(s, m1, m2, bn)

    out = pl.pallas_call(
        kernel,
        out_shape=jax.ShapeDtypeStruct((Bp, Np), out_dtype),
        grid_spec=pltpu.PrefetchScalarGridSpec(
            num_scalar_prefetch=0,
            grid=grid,
            in_specs=[x_spec, lbl_spec, w_spec, sw_spec],
            out_specs=out_spec,
            scratch_shapes=scratch,
        ),
        compiler_params=pltpu.CompilerParams(
            dimension_semantics=dims,
            vmem_limit_bytes=vmem_limit,
        ),
        cost_estimate=cost,
    )(x_n, label2d, w_c, s_inv_wn)

    if Bp != B or Np != N:
        out = out[:B, :N]
    return out


def _reference(x, label, weight, s=64.0, m1=0.5, m2=0.5):
    xn = x / jnp.maximum(jnp.linalg.norm(x, axis=1, keepdims=True), 1e-12)
    wn = weight / jnp.maximum(jnp.linalg.norm(weight, axis=1, keepdims=True), 1e-12)
    cosine = xn @ wn.T
    theta = jnp.arccos(jnp.clip(cosine, -1.0, 1.0))
    alpha = m1 / 2 * jnp.cos(2 * theta + math.pi) + m1 / 2
    beta = m2 / 2 * jnp.cos(2 * theta) + m2 / 2
    phi = cosine - alpha
    phj = cosine + beta
    one_hot = jax.nn.one_hot(label, weight.shape[0], dtype=cosine.dtype)
    return s * (one_hot * phi + (1.0 - one_hot) * phj)


if __name__ == "__main__":
    # Small shapes consistent with the module: (B, in_features) x (out_features, in_features)
    B, in_features, out_features = 16, 64, 256
    key = jax.random.PRNGKey(0)
    kx, kw, kl = jax.random.split(key, 3)

    x = jax.random.normal(kx, (B, in_features), dtype=jnp.float32)

    # Deterministic Xavier-uniform init of weight (out_features, in_features)
    limit = math.sqrt(6.0 / (in_features + out_features))
    weight = jax.random.uniform(
        kw, (out_features, in_features), dtype=jnp.float32, minval=-limit, maxval=limit
    )
    label = jax.random.randint(kl, (B,), 0, out_features, dtype=jnp.int32)

    ref = _reference(x, label, weight)

    # Precise path (f32 MXU operands): bit-tight vs the clipped-acos reference.
    out_f32 = jax.block_until_ready(
        miniloss_forward(x, label, weight, matmul_dtype=jnp.float32))
    assert out_f32.shape == (B, out_features)
    assert jnp.allclose(out_f32, ref, atol=1e-3, rtol=1e-3), "f32 path mismatch"

    # Default fast path (bf16 MXU operand streams; f32 accumulation / margin math).
    out_bf16 = jax.block_until_ready(miniloss_forward(x, label, weight))
    assert out_bf16.shape == (B, out_features)
    assert jnp.allclose(out_bf16, ref, atol=0.5, rtol=0.05), "bf16 path mismatch"

    print("KERNEL_OK")
</pallas_src>

<mosaic_0001>
module attributes {stable_mosaic.version = 11 : i64} {
  func.func @kernel(%arg0: i32, %arg1: i32, %arg2: memref<16x64xf32, #tpu.memory_space<vmem>>, %arg3: memref<16x1xi32, #tpu.memory_space<vmem>>, %arg4: memref<128x64xf32, #tpu.memory_space<vmem>>, %arg5: memref<1x128xf32, #tpu.memory_space<vmem>>, %arg6: memref<16x128xf32, #tpu.memory_space<vmem>>) attributes {dimension_semantics = [#tpu.dimension_semantics<parallel>, #tpu.dimension_semantics<parallel>], iteration_bounds = array<i64: 1, 2>, scalar_prefetch = 0 : i64, scratch_operands = 0 : i64, tpu.core_type = #tpu.core_type<tc>, window_params = [{transform_indices = @transform_0, window_bounds = array<i64: 16, 64>}, {transform_indices = @transform_1, window_bounds = array<i64: 16, 1>}, {transform_indices = @transform_2, window_bounds = array<i64: 128, 64>}, {transform_indices = @transform_3, window_bounds = array<i64: 1, 128>}, {transform_indices = @transform_4, window_bounds = array<i64: 16, 128>}]} {
    %c0 = arith.constant 0 : index
    %c0_0 = arith.constant 0 : index
    %0 = vector.load %arg2[%c0, %c0_0] : memref<16x64xf32, #tpu.memory_space<vmem>>, vector<16x64xf32>
    %c0_1 = arith.constant 0 : index
    %c0_2 = arith.constant 0 : index
    %1 = vector.load %arg4[%c0_1, %c0_2] : memref<128x64xf32, #tpu.memory_space<vmem>>, vector<128x64xf32>
    %cst = arith.constant dense<0.000000e+00> : vector<16x128xf32>
    %2 = tpu.matmul %0, %1, %cst {dimension_numbers = #tpu.dot_dimension_numbers<[1], [1], [0], [0], [0, 0, 1, 0], [], []>} : vector<16x64xf32>, vector<128x64xf32>, vector<16x128xf32> -> vector<16x128xf32>
    %c0_3 = arith.constant 0 : index
    %c0_4 = arith.constant 0 : index
    %3 = vector.load %arg5[%c0_3, %c0_4] : memref<1x128xf32, #tpu.memory_space<vmem>>, vector<1x128xf32>
    %c0_5 = arith.constant 0 : index
    %c0_6 = arith.constant 0 : index
    %4 = vector.load %arg3[%c0_5, %c0_6] : memref<16x1xi32, #tpu.memory_space<vmem>>, vector<16x1xi32>
    %5 = vector.broadcast %3 : vector<1x128xf32> to vector<16x128xf32>
    %6 = arith.mulf %2, %5 : vector<16x128xf32>
    %c128_i32 = arith.constant 128 : i32
    %7 = arith.muli %arg1, %c128_i32 : i32
    %8 = vector.broadcast %7 : i32 to vector<16x1xi32>
    %9 = arith.subi %4, %8 : vector<16x1xi32>
    %10 = tpu.iota {dimensions = array<i32: 1>} : vector<16x128xi32>
    %11 = vector.broadcast %9 : vector<16x1xi32> to vector<16x128xi32>
    %12 = arith.cmpi eq, %10, %11 : vector<16x128xi32>
    %13 = arith.mulf %6, %6 : vector<16x128xf32>
    %cst_7 = arith.constant 7.812500e-03 : f32
    %14 = vector.broadcast %cst_7 : f32 to vector<16x128xf32>
    %15 = arith.mulf %14, %13 : vector<16x128xf32>
    %16 = arith.addf %6, %15 : vector<16x128xf32>
    %cst_8 = arith.constant 3.200000e+01 : f32
    %17 = vector.broadcast %cst_8 : f32 to vector<16x128xf32>
    %18 = arith.subf %16, %17 : vector<16x128xf32>
    %19 = arith.select %12, %18, %16 : vector<16x128xi1>, vector<16x128xf32>
    %c0_9 = arith.constant 0 : index
    %c0_10 = arith.constant 0 : index
    %20 = vector.load %arg6[%c0_9, %c0_10] : memref<16x128xf32, #tpu.memory_space<vmem>>, vector<16x128xf32>
    tpu.vector_store %arg6[%c0_9, %c0_10], %19 {strides = array<i32>} : memref<16x128xf32, #tpu.memory_space<vmem>>, vector<16x128xf32>,
    return
  }
  func.func @transform_0(%arg0: i32, %arg1: i32) -> (i32, i32) {
    %c0_i32 = arith.constant 0 : i32
    %c0_i32_0 = arith.constant 0 : i32
    return %arg0, %c0_i32 : i32, i32
  }
  func.func @transform_1(%arg0: i32, %arg1: i32) -> (i32, i32) {
    %c0_i32 = arith.constant 0 : i32
    %c0_i32_0 = arith.constant 0 : i32
    return %arg0, %c0_i32 : i32, i32
  }
  func.func @transform_2(%arg0: i32, %arg1: i32) -> (i32, i32) {
    %c0_i32 = arith.constant 0 : i32
    %c0_i32_0 = arith.constant 0 : i32
    return %arg1, %c0_i32 : i32, i32
  }
  func.func @transform_3(%arg0: i32, %arg1: i32) -> (i32, i32) {
    %c0_i32 = arith.constant 0 : i32
    %c0_i32_0 = arith.constant 0 : i32
    return %c0_i32, %arg1 : i32, i32
  }
  func.func @transform_4(%arg0: i32, %arg1: i32) -> (i32, i32) {
    %c0_i32 = arith.constant 0 : i32
    return %arg0, %arg1 : i32, i32
  }
}

</mosaic_0001>

<llo_original>
// kernel: tpu_custom_call.1
$region0: #{tpu_custom_call.1}
  #allocation0 [shape = 'u32[]', space=smem, size = 0x4, offset = 0x4, fixed_abs, tag = 'smem constant byte address 0x4 - core index']
  #allocation1 [shape = 'u32[144,128]{1,0:T(1,128)}', space=vmem, size = 0x12000, scoped, tag = 'internal scratch']
  %s0 = inlined_call_operand.vmem [shape: f32[16,64], index: 0, kind: input, shape index: {}]
  %s1 = inlined_call_operand.vmem [shape: s32[16,1], index: 1, kind: input, shape index: {}]
  %s2 = inlined_call_operand.vmem [shape: f32[256,64], index: 2, kind: input, shape index: {}]
  %s3 = inlined_call_operand.vmem [shape: f32[1,256], index: 3, kind: input, shape index: {}]
  %s4 = inlined_call_operand.hbm [shape: f32[16,256], index: 4, kind: output, shape index: {}]
  %s5 = sld [smem:[#allocation0]]
  $region49: #{tpu_custom_call.1} parent=0
    _
  %s7 = ssub.s32 1, %s5
  %s8 = scalar_select 0, %s7, %s5
  $region1: #{tpu_custom_call.1} parent=0
    #allocation2 [shape = 'u8[16384]{0}', space=vmem, size = 0x4000, scoped, tag = 'output window, operand 0']
    #allocation3 [shape = 's32[2]{0}', space=sflag, size = 0x8, scoped, tag = 'scoped memory for tpu_custom_call.1']
    %9 = vsyncpa [#allocation3], 0
    %s10 = scalar_lea.sflag [#allocation3], 1
    %11 = vsyncpa %s10, 0
    loop: start=0, step=1, limit=4
    $region2: #{tpu_custom_call.1} parent=1 // loop_pre_header
      _
    $region3: #{tpu_custom_call.1} parent=1 // loop_header
      %s13 = sphi 0, %s17
      %p14 = scmp.ge.s32.totalorder %s13, 4
      %s20 = sphi 0, %s32
      %s21 = sphi 0, %s28
      %s22 = sphi 0, %s20
      %s23 = sphi 0, %s21
      %s24 = sphi 0, %s22
      %s25 = sphi 0, %s23
      %s35 = sphi 0, %s37
      %s38 = sphi 0, %s35
      %s39 = sphi 0, %s38
      %s55 = sphi 0, %s39
      %s61 = sphi 0, %s63
      %s64 = sphi 0, %s61
      %s65 = sphi 0, %s64
      %s81 = sphi 0, %s65
      %s87 = sphi 0, %s89
      %s90 = sphi 0, %s87
      %s91 = sphi 0, %s90
      %s107 = sphi 0, %s91
      %s113 = sphi 0, %s115
      %s116 = sphi 0, %s113
      %s117 = sphi 0, %s116
      %s133 = sphi 0, %s117
      %s141 = sphi 0, %s143
      %s144 = sphi 0, %s141
      %s145 = sphi 0, %s144
      %s161 = sphi 0, %s145
    $region4: #{tpu_custom_call.1} parent=1 // loop_header_branch
      %16 = sbr.rel (%p14) target = $region8
    $region5: #{tpu_custom_call.1} parent=1 // loop_body
      %s18 = ssub.s32 %s13, 1
      %s19 = ssub.s32 %s13, 2
      %s26 = sadd.s32 1, %s21
      %p27 = scmp.ge.s32.totalorder %s26, 2
      %s28 = scalar_select %p27, 0, %s26
      %s29 = sadd.s32 1, %s20
      %s30 = scalar_select %p27, %s29, %s20
      %p31 = scmp.ge.s32.totalorder %s30, 1
      %s32 = scalar_select %p31, 0, %s30
      %s33 = ssub.s32 %s20, %s32
      %p34 = scmp.eq.s32.totalorder %s33, 0
      %s36 = sadd.s32 %s35, 1
      %s37 = scalar_select %p34, %s35, %s36
      %p40 = pneg %p34
      %p41 = scmp.eq.s32.totalorder %s13, 1
      %p42 = por %p40, %p41
      %p43 = scmp.ne.s32.totalorder %s35, %s38
      %p44 = scmp.eq.s32.totalorder %s13, 0
      %p45 = por %p43, %p44
      %p46 = scmp.ne.s32.totalorder %s35, %s38
      %p47 = scmp.eq.s32.totalorder %s18, 1
      %p48 = por %p46, %p47
      %p49 = scmp.ne.s32.totalorder %s38, %s39
      %p50 = scmp.eq.s32.totalorder %s18, 0
      %p51 = por %p49, %p50
      %p52 = scmp.ne.s32.totalorder %s38, %s39
      %p53 = scmp.eq.s32.totalorder %s19, 1
      %p54 = por %p52, %p53
      %p56 = scmp.ne.s32.totalorder %s39, %s55
      %p57 = scmp.eq.s32.totalorder %s19, 0
      %p58 = por %p56, %p57
      %s59 = ssub.s32 %s20, %s32
      %p60 = scmp.eq.s32.totalorder %s59, 0
      %s62 = sadd.s32 %s61, 1
      %s63 = scalar_select %p60, %s61, %s62
      %p66 = pneg %p60
      %p67 = scmp.eq.s32.totalorder %s13, 1
      %p68 = por %p66, %p67
      %p69 = scmp.ne.s32.totalorder %s61, %s64
      %p70 = scmp.eq.s32.totalorder %s13, 0
      %p71 = por %p69, %p70
      %p72 = scmp.ne.s32.totalorder %s61, %s64
      %p73 = scmp.eq.s32.totalorder %s18, 1
      %p74 = por %p72, %p73
      %p75 = scmp.ne.s32.totalorder %s64, %s65
      %p76 = scmp.eq.s32.totalorder %s18, 0
      %p77 = por %p75, %p76
      %p78 = scmp.ne.s32.totalorder %s64, %s65
      %p79 = scmp.eq.s32.totalorder %s19, 1
      %p80 = por %p78, %p79
      %p82 = scmp.ne.s32.totalorder %s65, %s81
      %p83 = scmp.eq.s32.totalorder %s19, 0
      %p84 = por %p82, %p83
      %s85 = ssub.s32 %s21, %s28
      %p86 = scmp.eq.s32.totalorder %s85, 0
      %s88 = sadd.s32 %s87, 1
      %s89 = scalar_select %p86, %s87, %s88
      %p92 = pneg %p86
      %p93 = scmp.eq.s32.totalorder %s13, 1
      %p94 = por %p92, %p93
      %p95 = scmp.ne.s32.totalorder %s87, %s90
      %p96 = scmp.eq.s32.totalorder %s13, 0
      %p97 = por %p95, %p96
      %p98 = scmp.ne.s32.totalorder %s87, %s90
      %p99 = scmp.eq.s32.totalorder %s18, 1
      %p100 = por %p98, %p99
      %p101 = scmp.ne.s32.totalorder %s90, %s91
      %p102 = scmp.eq.s32.totalorder %s18, 0
      %p103 = por %p101, %p102
      %p104 = scmp.ne.s32.totalorder %s90, %s91
      %p105 = scmp.eq.s32.totalorder %s19, 1
      %p106 = por %p104, %p105
      %p108 = scmp.ne.s32.totalorder %s91, %s107
      %p109 = scmp.eq.s32.totalorder %s19, 0
      %p110 = por %p108, %p109
      %s111 = ssub.s32 %s21, %s28
      %p112 = scmp.eq.s32.totalorder %s111, 0
      %s114 = sadd.s32 %s113, 1
      %s115 = scalar_select %p112, %s113, %s114
      %p118 = pneg %p112
      %p119 = scmp.eq.s32.totalorder %s13, 1
      %p120 = por %p118, %p119
      %p121 = scmp.ne.s32.totalorder %s113, %s116
      %p122 = scmp.eq.s32.totalorder %s13, 0
      %p123 = por %p121, %p122
      %p124 = scmp.ne.s32.totalorder %s113, %s116
      %p125 = scmp.eq.s32.totalorder %s18, 1
      %p126 = por %p124, %p125
      %p127 = scmp.ne.s32.totalorder %s116, %s117
      %p128 = scmp.eq.s32.totalorder %s18, 0
      %p129 = por %p127, %p128
      %p130 = scmp.ne.s32.totalorder %s116, %s117
      %p131 = scmp.eq.s32.totalorder %s19, 1
      %p132 = por %p130, %p131
      %p134 = scmp.ne.s32.totalorder %s117, %s133
      %p135 = scmp.eq.s32.totalorder %s19, 0
      %p136 = por %p134, %p135
      %s137 = ssub.s32 %s20, %s32
      %s138 = ssub.s32 %s21, %s28
      %s139 = sor.u32 %s137, %s138
      %p140 = scmp.eq.s32.totalorder %s139, 0
      %s142 = sadd.s32 %s141, 1
      %s143 = scalar_select %p140, %s141, %s142
      %p146 = pneg %p140
      %p147 = scmp.eq.s32.totalorder %s13, 1
      %p148 = por %p146, %p147
      %p149 = scmp.ne.s32.totalorder %s141, %s144
      %p150 = scmp.eq.s32.totalorder %s13, 0
      %p151 = por %p149, %p150
      %p152 = scmp.ne.s32.totalorder %s141, %s144
      %p153 = scmp.eq.s32.totalorder %s18, 1
      %p154 = por %p152, %p153
      %p155 = scmp.ne.s32.totalorder %s144, %s145
      %p156 = scmp.eq.s32.totalorder %s18, 0
      %p157 = por %p155, %p156
      %p158 = scmp.ne.s32.totalorder %s144, %s145
      %p159 = scmp.eq.s32.totalorder %s19, 1
      %p160 = por %p158, %p159
      %p162 = scmp.ne.s32.totalorder %s145, %s161
      %p163 = scmp.eq.s32.totalorder %s19, 0
      %p164 = por %p162, %p163
      %p165 = scmp.le.s32.totalorder 1, %s13
      %p166 = scmp.lt.s32.totalorder %s13, 3
      %p167 = pnand %p165, %p166
      %p168 = pneg %p167
      // Predicated region
      $region9: #{tpu_custom_call.1} parent=5 // pred_check
        _
      $region10: #{tpu_custom_call.1} parent=5 // pred_check_branch
        %170 = sbr.rel (%p167) target = $region12
      $region11: #{tpu_custom_call.1} parent=5 // pred_region
        %s171 = ssub.s32 %s13, 1
        // Predicated region
        $region13: #{tpu_custom_call.1} parent=11 // pred_check
          %p172 = pneg %p51
        $region14: #{tpu_custom_call.1} parent=11 // pred_check_branch
          %174 = sbr.rel (%p172) target = $region16
        $region15: #{tpu_custom_call.1} parent=11 // pred_region
          %s175 = smul.u32 2, %s22
          %p176 = scmp.lt.s32.totalorder %s175, 1
          %s177 = scalar_select %p176, %s175, 1
          %s178 = smul.addr %s177, 8
          %s179 = scalar_lea.vmem %s0, %s178
          %s180 = smul.u32 2, %s22
        $region16: #{tpu_custom_call.1} parent=11 // pred_fallthru
          _
        // Predicated region
        $region17: #{tpu_custom_call.1} parent=11 // pred_check
          %p181 = pneg %p77
        $region18: #{tpu_custom_call.1} parent=11 // pred_check_branch
          %183 = sbr.rel (%p181) target = $region20
        $region19: #{tpu_custom_call.1} parent=11 // pred_region
          %s184 = smul.u32 2, %s22
          %p185 = scmp.lt.s32.totalorder %s184, 1
          %s186 = scalar_select %p185, %s184, 1
          %s187 = smul.addr %s186, 8
          %s188 = scalar_lea.vmem %s1, %s187
          %s189 = smul.u32 2, %s22
        $region20: #{tpu_custom_call.1} parent=11 // pred_fallthru
          _
      $region12: #{tpu_custom_call.1} parent=5 // pred_fallthru
        _
      %p190 = scmp.lt.s32.totalorder %s13, 2
      // Predicated region
      $region21: #{tpu_custom_call.1} parent=5 // pred_check
        %p191 = pneg %p190
      $region22: #{tpu_custom_call.1} parent=5 // pred_check_branch
        %193 = sbr.rel (%p191) target = $region24
      $region23: #{tpu_custom_call.1} parent=5 // pred_region
        // Predicated region
        $region25: #{tpu_custom_call.1} parent=23 // pred_check
          %p194 = pneg %p97
        $region26: #{tpu_custom_call.1} parent=23 // pred_check_branch
          %196 = sbr.rel (%p194) target = $region28
        $region27: #{tpu_custom_call.1} parent=23 // pred_region
          %s197 = smul.u32 16, %s21
          %p198 = scmp.lt.s32.totalorder %s197, 31
          %s199 = scalar_select %p198, %s197, 31
          %s200 = smul.addr %s199, 8
          %s201 = scalar_lea.vmem %s2, %s200
          %s202 = smul.u32 16, %s21
        $region28: #{tpu_custom_call.1} parent=23 // pred_fallthru
          _
        // Predicated region
        $region29: #{tpu_custom_call.1} parent=23 // pred_check
          %p203 = pneg %p123
        $region30: #{tpu_custom_call.1} parent=23 // pred_check_branch
          %205 = sbr.rel (%p203) target = $region32
        $region31: #{tpu_custom_call.1} parent=23 // pred_region
          %p206 = scmp.lt.s32.totalorder %s21, 1
          %s207 = scalar_select %p206, %s21, 1
          %s208 = scalar_lea.vmem %s3, %s207
        $region32: #{tpu_custom_call.1} parent=23 // pred_fallthru
          _
      $region24: #{tpu_custom_call.1} parent=5 // pred_fallthru
        _
      %p209 = scmp.le.s32.totalorder 1, %s13
      %p210 = scmp.lt.s32.totalorder %s13, 3
      %p211 = pnand %p209, %p210
      %p212 = pneg %p211
      // Predicated region
      $region33: #{tpu_custom_call.1} parent=5 // pred_check
        _
      $region34: #{tpu_custom_call.1} parent=5 // pred_check_branch
        %214 = sbr.rel (%p211) target = $region36
      $region35: #{tpu_custom_call.1} parent=5 // pred_region
        %s215 = ssub.s32 %s13, 1
        %s216 = smul.u32 2, %s22
        %p217 = scmp.lt.s32.totalorder %s216, 1
        %s218 = scalar_select %p217, %s216, 1
        %s219 = smul.addr %s218, 8
        %s220 = scalar_lea.vmem %s0, %s219
        %p221 = pneg %p51
        %p222 = pneg %p48
        %s223 = smul.u32 2, %s22
        %p224 = scmp.lt.s32.totalorder %s223, 1
        %s225 = scalar_select %p224, %s223, 1
        %s226 = smul.addr %s225, 8
        %s227 = scalar_lea.vmem %s1, %s226
        %p228 = pneg %p77
        %p229 = pneg %p74
        %s230 = smul.u32 16, %s23
        %p231 = scmp.lt.s32.totalorder %s230, 31
        %s232 = scalar_select %p231, %s230, 31
        %s233 = smul.addr %s232, 8
        %s234 = scalar_lea.vmem %s2, %s233
        %p235 = pneg %p103
        %p236 = pneg %p100
        %p237 = scmp.lt.s32.totalorder %s23, 1
        %s238 = scalar_select %p237, %s23, 1
        %s239 = scalar_lea.vmem %s3, %s238
        %p240 = pneg %p129
        %p241 = pneg %p126
        %p242 = pneg %p157
        %p243 = pneg %p154
        %s244 = sand.u32 %s144, 1
        %s245 = scalar_lea.sflag [#allocation3], %s244
        %s246 = sand.u32 %s144, 1
        %s247 = smul.addr %s246, 16
        %s248 = scalar_lea.vmem [#allocation2], %s247
        %s249 = smul.u32 2, %s22
        %p250 = scmp.lt.s32.totalorder %s249, 1
        %s251 = scalar_select %p250, %s249, 1
        %s252 = smul.addr %s251, 8
        %s253 = scalar_lea.vmem %s0, %s252
        %s254 = smul.u32 2, %s22
        %s255 = smul.u32 2, %s22
        %p256 = scmp.lt.s32.totalorder %s255, 1
        %s257 = scalar_select %p256, %s255, 1
        %s258 = smul.addr %s257, 8
        %s259 = scalar_lea.vmem %s1, %s258
        %s260 = smul.u32 2, %s22
        %s261 = smul.u32 16, %s23
        %p262 = scmp.lt.s32.totalorder %s261, 31
        %s263 = scalar_select %p262, %s261, 31
        %s264 = smul.addr %s263, 8
        %s265 = scalar_lea.vmem %s2, %s264
        %s266 = smul.u32 16, %s23
        %p267 = scmp.lt.s32.totalorder %s23, 1
        %s268 = scalar_select %p267, %s23, 1
        %s269 = scalar_lea.vmem %s3, %s268
        %s270 = smul.u32 2, %s22
        %v271 = vld [vmem:[%s253] sm:$0xff]
        %v272 = vld [vmem:[%s253 + $0x8] sm:$0xff]
        %v273 = vld [vmem:[%s265] sm:$0xff]
        %v274 = vld [vmem:[%s265 + $0x8] sm:$0xff]
        %v275 = vld [vmem:[%s265 + $0x10] sm:$0xff]
        %v276 = vld [vmem:[%s265 + $0x18] sm:$0xff]
        %v277 = vld [vmem:[%s265 + $0x20] sm:$0xff]
        %v278 = vld [vmem:[%s265 + $0x28] sm:$0xff]
        %v279 = vld [vmem:[%s265 + $0x30] sm:$0xff]
        %v280 = vld [vmem:[%s265 + $0x38] sm:$0xff]
        %v281 = vld [vmem:[%s265 + $0x40] sm:$0xff]
        %v282 = vld [vmem:[%s265 + $0x48] sm:$0xff]
        %v283 = vld [vmem:[%s265 + $0x50] sm:$0xff]
        %v284 = vld [vmem:[%s265 + $0x58] sm:$0xff]
        %v285 = vld [vmem:[%s265 + $0x60] sm:$0xff]
        %v286 = vld [vmem:[%s265 + $0x68] sm:$0xff]
        %v287 = vld [vmem:[%s265 + $0x70] sm:$0xff]
        %v288 = vld [vmem:[%s265 + $0x78] sm:$0xff]
        %vm289 = vcmask 523264
        %v291 = vsel %vm289, %v271, 0
        %v294 = vsel %vm289, %v272, 0
        %v297 = vsel %vm289, %v273, 0
        %v300 = vsel %vm289, %v274, 0
        %v303 = vsel %vm289, %v275, 0
        %v306 = vsel %vm289, %v276, 0
        %v309 = vsel %vm289, %v277, 0
        %v312 = vsel %vm289, %v278, 0
        %v315 = vsel %vm289, %v279, 0
        %v318 = vsel %vm289, %v280, 0
        %v321 = vsel %vm289, %v281, 0
        %v324 = vsel %vm289, %v282, 0
        %v327 = vsel %vm289, %v283, 0
        %v330 = vsel %vm289, %v284, 0
        %v333 = vsel %vm289, %v285, 0
        %v336 = vsel %vm289, %v286, 0
        %v339 = vsel %vm289, %v287, 0
        %v342 = vsel %vm289, %v288, 0
        %344 = vmatprep.subr.mxu0 0.0
        %345 = vmatpush1.xpose.msra.mxu0 %v297
        %346 = vmatprep.subr.mxu0 0.0
        %347 = vmatpush1.xpose.msra.mxu0 %v300
        %348 = vmatprep.subr.mxu0 0.0
        %349 = vmatpush1.xpose.msra.mxu0 %v303
        %350 = vmatprep.subr.mxu0 0.0
        %351 = vmatpush1.xpose.msra.mxu0 %v306
        %352 = vmatprep.subr.mxu0 0.0
        %353 = vmatpush1.xpose.msra.mxu0 %v309
        %354 = vmatprep.subr.mxu0 0.0
        %355 = vmatpush1.xpose.msra.mxu0 %v312
        %356 = vmatprep.subr.mxu0 0.0
        %357 = vmatpush1.xpose.msra.mxu0 %v315
        %358 = vmatprep.subr.mxu0 0.0
        %359 = vmatpush1.xpose.msra.mxu0 %v318
        %360 = vmatprep.subr.mxu0 0.0
        %361 = vmatpush1.xpose.msra.mxu0 %v321
        %362 = vmatprep.subr.mxu0 0.0
        %363 = vmatpush1.xpose.msra.mxu0 %v324
        %364 = vmatprep.subr.mxu0 0.0
        %365 = vmatpush1.xpose.msra.mxu0 %v327
        %366 = vmatprep.subr.mxu0 0.0
        %367 = vmatpush1.xpose.msra.mxu0 %v330
        %368 = vmatprep.subr.mxu0 0.0
        %369 = vmatpush1.xpose.msra.mxu0 %v333
        %370 = vmatprep.subr.mxu0 0.0
        %371 = vmatpush1.xpose.msra.mxu0 %v336
        %372 = vmatprep.subr.mxu0 0.0
        %373 = vmatpush1.xpose.msra.mxu0 %v339
        %374 = vmatprep.subr.mxu0 0.0
        %375 = vmatpush1.xpose.msra.mxu0 %v342
        %376 = vmatprep.subr.mxu0 0.0
        %377 = vmatpush1.xpose.msra.mxu0 0.0
        %378 = vmatprep.subr.mxu0 0.0
        %379 = vmatpush1.xpose.msra.mxu0 0.0
        %380 = vmatprep.subr.mxu0 0.0
        %381 = vmatpush1.xpose.msra.mxu0 0.0
        %382 = vmatprep.subr.mxu0 0.0
        %383 = vmatpush1.xpose.msra.mxu0 0.0
        %384 = vmatprep.subr.mxu0 0.0
        %385 = vmatpush1.xpose.msra.mxu0 0.0
        %386 = vmatprep.subr.mxu0 0.0
        %387 = vmatpush1.xpose.msra.mxu0 0.0
        %388 = vmatprep.subr.mxu0 0.0
        %389 = vmatpush1.xpose.msra.mxu0 0.0
        %390 = vmatprep.subr.mxu0 0.0
        %391 = vmatpush1.xpose.msra.mxu0 0.0
        %392 = vmatprep.subr.mxu0 0.0
        %393 = vmatpush1.xpose.msra.mxu0 0.0
        %394 = vmatprep.subr.mxu0 0.0
        %395 = vmatpush1.xpose.msra.mxu0 0.0
        %396 = vmatprep.subr.mxu0 0.0
        %397 = vmatpush1.xpose.msra.mxu0 0.0
        %398 = vmatprep.subr.mxu0 0.0
        %399 = vmatpush1.xpose.msra.mxu0 0.0
        %400 = vmatprep.subr.mxu0 0.0
        %401 = vmatpush1.xpose.msra.mxu0 0.0
        %402 = vmatprep.subr.mxu0 0.0
        %403 = vmatpush1.xpose.msra.mxu0 0.0
        %404 = vmatprep.subr.mxu0 0.0
        %405 = vmatpush1.xpose.msra.mxu0 0.0
        %406 = vmatprep.subr.mxu0 0.0
        %407 = vmatpush1.xpose.msra.mxu0 0.0
        %408 = vmatprep.mubr.f32.mxu0 0.0
        %409 = vmatmul.mubr.f32.gmra.mrb[0].mxu0 %v291
        %v410 = vpop.f32.mrb[0].mxu0
        %v411 = vadd.f32 0.0, %v410
        %v412 = vpop.f32.mrb[0].mxu0
        %413 = vmatprep.mubr.f32.mxu0 0.0
        %414 = vmatmul.mubr.f32.gmra.mrb[0].mxu0 %v294
        %v415 = vpop.f32.mrb[0].mxu0
        %v416 = vadd.f32 0.0, %v415
        %v417 = vpop.f32.mrb[0].mxu0
        %418 = vdwg.mxu0
        %v419 = vld [vmem:[%s269] sm:$0x1]
        %v420 = vld [vmem:[%s259] sm:$0xff]
        %v421 = vld [vmem:[%s259 + $0x8] sm:$0xff]
        %v423 = vlaneseq
        %v424 = vshrl.u32 %v423, 7
        %v425 = vsub.s32 0, %v424
        %v426 = vrot.slane %v419, %v425
        %v428 = vmul.f32 %v411, %v426
        %v429 = vmul.f32 %v416, %v426
        %s430 = smul.u32 %s23, 128
        %v431 = vstv %s430
        %v432 = vsub.s32 %v420, %v431
        %v433 = vsub.s32 %v421, %v431
        %v434 = vlaneseq
        %v435 = vand.u32 %v434, 127
        %436 = vset.pattern.permute.xlu0 0
        %437 = vperm.xlu0 %436, %v432
        %v438 = vpop.permute.xlu0 %437
        %439 = vset.pattern.permute.xlu0 0
        %440 = vperm.xlu0 %439, %v433
        %v441 = vpop.permute.xlu0 %440
        %vm442 = vcmp.eq.s32.totalorder %v435, %v438
        %vm443 = vcmp.eq.s32.totalorder %v435, %v441
        %v444 = vmul.f32 %v428, %v428
        %v445 = vmul.f32 %v429, %v429
        %v446 = vmul.f32 %v444, 0.0078125
        %v447 = vmul.f32 %v445, 0.0078125
        %v448 = vadd.f32 %v428, %v446
        %v449 = vadd.f32 %v429, %v447
        %v450 = vsub.f32 %v448, 32.0
        %v451 = vsub.f32 %v449, 32.0
        %v452 = vsel %vm442, %v450, %v448
        %v453 = vsel %vm443, %v451, %v449
        %454 = vst [vmem:[%s248] sm:$0xff] %v452
        %455 = vst [vmem:[%s248 + $0x8] sm:$0xff] %v453
        %s456 = sand.u32 %s144, 1
        %s457 = scalar_lea.sflag [#allocation3], %s456
        %s458 = sand.u32 %s144, 1
        %s459 = smul.addr %s458, 16
        %s460 = scalar_lea.vmem [#allocation2], %s459
        // Predicated region
        $region37: #{tpu_custom_call.1} parent=35 // pred_check
          %p461 = pneg %p154
        $region38: #{tpu_custom_call.1} parent=35 // pred_check_branch
          %463 = sbr.rel (%p461) target = $region40
        $region39: #{tpu_custom_call.1} parent=35 // pred_region
          %s464 = smul.u32 2, %s22
          %s466 = ssub.s32 256, 256
          %467 = vsyncadd %s457, %s466
          %s468 = smul.addr %s464, 2
          %s469 = sadd.s32 %s23, %s468
          %s470 = smul.addr %s469, 128
          %s471 = scalar_lea.hbm %s4, %s470
          %s472 = sshll.u32 %s460, 4
          %s473 = int_to_ptr.vmem [resolvable:$true] %s472
          %478 = dma.vmem_to_hbm [thread:$0]  %s473, 256, %s471, %s457, 128, 256, 8
        $region40: #{tpu_custom_call.1} parent=35 // pred_fallthru
          _
      $region36: #{tpu_custom_call.1} parent=5 // pred_fallthru
        _
      %p479 = scmp.le.s32.totalorder 2, %s13
      // Predicated region
      $region41: #{tpu_custom_call.1} parent=5 // pred_check
        %p480 = pneg %p479
      $region42: #{tpu_custom_call.1} parent=5 // pred_check_branch
        %482 = sbr.rel (%p480) target = $region44
      $region43: #{tpu_custom_call.1} parent=5 // pred_region
        %s483 = ssub.s32 %s13, 2
        // Predicated region
        $region45: #{tpu_custom_call.1} parent=43 // pred_check
          %p484 = pneg %p160
        $region46: #{tpu_custom_call.1} parent=43 // pred_check_branch
          %486 = sbr.rel (%p484) target = $region48
        $region47: #{tpu_custom_call.1} parent=43 // pred_region
          %s487 = sand.u32 %s145, 1
          %s488 = scalar_lea.sflag [#allocation3], %s487
          %s489 = sand.u32 %s145, 1
          %s490 = smul.addr %s489, 16
          %s491 = scalar_lea.vmem [#allocation2], %s490
          %492 = dma.done %s488, 256
        $region48: #{tpu_custom_call.1} parent=43 // pred_fallthru
          _
      $region44: #{tpu_custom_call.1} parent=5 // pred_fallthru
        _
    $region6: #{tpu_custom_call.1} parent=1 // loop_footer
      %s17 = sadd.s32 1, %s13
    $region7: #{tpu_custom_call.1} parent=1 // loop_footer_branch
      %12 = sbr.rel target = $region3
    $region8: #{tpu_custom_call.1} parent=1 // loop_exit
      _
    %493 = vsyncpa [#allocation3], 1
    %s494 = scalar_lea.sflag [#allocation3], 1
    %495 = vsyncpa %s494, 1

</llo_original>
